<compile_context>
chip_gen: v7x
topology: tpu7x:2x2x1
jax: 0.10.0
libtpu: 0.0.40
codegen_flags: <defaults>
</compile_context>

<pallas_src>
import math

import jax
import jax.numpy as jnp
from jax.experimental import pallas as pl
from jax.experimental.pallas import tpu as pltpu


def _round_up(x, m):
    return ((x + m - 1) // m) * m


def _mlp_kernel(x_ref, w_ref, b_ref, o_ref):
    # x_ref: [TM, K], w_ref: [K, TN], b_ref: [1, TN], o_ref: [TM, TN]
    y = jnp.dot(x_ref[...], w_ref[...], preferred_element_type=jnp.float32)
    y = y + b_ref[...].astype(jnp.float32)
    # LeakyReLU(0.1) on the f32 accumulator (cheap VPU select, f32 on all chips).
    y = jnp.where(y >= 0, y, 0.1 * y)
    o_ref[...] = y.astype(o_ref.dtype)
    # TODO(synk): nn.Dropout is identity at inference (use_drop defaults to False),
    # so no dropout mask is applied here.


def mlp_forward(x, w, b, *, tm=256, tn=512, compute_dtype=None,
                vmem_budget_bytes=24 * 1024 * 1024):
    """x: [..., in_ch], w: [in_ch, out_ch], b: [out_ch] -> [..., out_ch]

    compute_dtype: optionally cast x/W (e.g. jnp.bfloat16) for MXU throughput;
    accumulation stays in f32 and the output keeps x's original dtype.
    """
    in_ch = x.shape[-1]
    out_ch = w.shape[-1]
    lead_shape = x.shape[:-1]
    m = math.prod(lead_shape) if lead_shape else 1
    out_dtype = x.dtype

    if compute_dtype is not None:
        x = x.astype(compute_dtype)
        w = w.astype(compute_dtype)

    x2d = x.reshape(m, in_ch)
    b2d = b.reshape(1, out_ch).astype(jnp.float32)

    # Lane/sublane aligned tile sizes (sublane=8, lane=128), capped at problem size.
    tm = min(tm, _round_up(m, 8))
    tn = min(tn, _round_up(out_ch, 128))

    # Keep the double-buffered working set within the VMEM budget
    # (v7x: 64 MiB physical / 32 MiB scoped default).
    in_bytes = x2d.dtype.itemsize
    out_bytes = jnp.dtype(out_dtype).itemsize

    def _vmem_est(tm_, tn_):
        return 2 * ((tm_ * in_ch + in_ch * tn_) * in_bytes
                    + tn_ * 4 + tm_ * tn_ * out_bytes)

    while _vmem_est(tm, tn) > vmem_budget_bytes and tm > 8:
        tm = max(8, _round_up(tm // 2, 8))
    while _vmem_est(tm, tn) > vmem_budget_bytes and tn > 128:
        tn = max(128, _round_up(tn // 2, 128))

    m_pad = _round_up(m, tm)
    n_pad = _round_up(out_ch, tn)

    if m_pad != m:
        x2d = jnp.pad(x2d, ((0, m_pad - m), (0, 0)))
    w_p = w if n_pad == out_ch else jnp.pad(w, ((0, 0), (0, n_pad - out_ch)))
    b_p = b2d if n_pad == out_ch else jnp.pad(b2d, ((0, 0), (0, n_pad - out_ch)))

    # Grid: j (N tiles) outermost, i (M tiles) innermost -> the W/bias tiles keep the
    # same block index across the inner M sweep and are not re-DMA'd.
    grid = (n_pad // tn, m_pad // tm)

    out = pl.pallas_call(
        _mlp_kernel,
        out_shape=jax.ShapeDtypeStruct((m_pad, n_pad), out_dtype),
        grid=grid,
        in_specs=[
            pl.BlockSpec((tm, in_ch), lambda j, i: (i, 0)),   # x tile: depends on i only
            pl.BlockSpec((in_ch, tn), lambda j, i: (0, j)),   # W tile: depends on j only
            pl.BlockSpec((1, tn), lambda j, i: (0, j)),       # bias tile: depends on j only
        ],
        out_specs=pl.BlockSpec((tm, tn), lambda j, i: (i, j)),
        compiler_params=pltpu.CompilerParams(
            dimension_semantics=("parallel", "parallel"),
            vmem_limit_bytes=32 * 1024 * 1024,
        ),
    )(x2d, w_p, b_p)

    out = out[:m, :out_ch]
    return out.reshape(*lead_shape, out_ch)


if __name__ == "__main__":
    key = jax.random.PRNGKey(0)
    k_x, k_w, k_b = jax.random.split(key, 3)

    batch, seq, in_ch, out_ch = 2, 8, 32, 64

    x = jax.random.normal(k_x, (batch, seq, in_ch), dtype=jnp.float32)
    # Deterministic parameter init (Kaiming-uniform-like range, fixed seed).
    bound = 1.0 / (in_ch ** 0.5)
    w = jax.random.uniform(k_w, (in_ch, out_ch), minval=-bound, maxval=bound,
                           dtype=jnp.float32)
    b = jax.random.uniform(k_b, (out_ch,), minval=-bound, maxval=bound,
                           dtype=jnp.float32)

    y = mlp_forward(x, w, b)
    jax.block_until_ready(y)

    # Reference check in plain JAX.
    ref = x @ w + b
    ref = jnp.where(ref >= 0, ref, 0.1 * ref)
    assert y.shape == (batch, seq, out_ch)
    assert jnp.allclose(y, ref, atol=1e-5, rtol=1e-5)

    print("KERNEL_OK")
</pallas_src>

<mosaic_0001>
module attributes {stable_mosaic.version = 11 : i64} {
  func.func @_mlp_kernel(%arg0: i32, %arg1: i32, %arg2: memref<16x32xf32, #tpu.memory_space<vmem>>, %arg3: memref<32x128xf32, #tpu.memory_space<vmem>>, %arg4: memref<1x128xf32, #tpu.memory_space<vmem>>, %arg5: memref<16x128xf32, #tpu.memory_space<vmem>>) attributes {dimension_semantics = [#tpu.dimension_semantics<parallel>, #tpu.dimension_semantics<parallel>], iteration_bounds = array<i64: 1, 1>, scalar_prefetch = 0 : i64, scratch_operands = 0 : i64, tpu.core_type = #tpu.core_type<tc>, window_params = [{transform_indices = @transform_0, window_bounds = array<i64: 16, 32>}, {transform_indices = @transform_1, window_bounds = array<i64: 32, 128>}, {transform_indices = @transform_2, window_bounds = array<i64: 1, 128>}, {transform_indices = @transform_3, window_bounds = array<i64: 16, 128>}]} {
    %c0 = arith.constant 0 : index
    %c0_0 = arith.constant 0 : index
    %0 = vector.load %arg2[%c0, %c0_0] : memref<16x32xf32, #tpu.memory_space<vmem>>, vector<16x32xf32>
    %c0_1 = arith.constant 0 : index
    %c0_2 = arith.constant 0 : index
    %1 = vector.load %arg3[%c0_1, %c0_2] : memref<32x128xf32, #tpu.memory_space<vmem>>, vector<32x128xf32>
    %cst = arith.constant dense<0.000000e+00> : vector<16x128xf32>
    %2 = tpu.matmul %0, %1, %cst {dimension_numbers = #tpu.dot_dimension_numbers<[1], [0], [0], [1], [0, 0, 1, 1], [], []>} : vector<16x32xf32>, vector<32x128xf32>, vector<16x128xf32> -> vector<16x128xf32>
    %c0_3 = arith.constant 0 : index
    %c0_4 = arith.constant 0 : index
    %3 = vector.load %arg4[%c0_3, %c0_4] : memref<1x128xf32, #tpu.memory_space<vmem>>, vector<1x128xf32>
    %4 = vector.broadcast %3 : vector<1x128xf32> to vector<16x128xf32>
    %5 = arith.addf %2, %4 : vector<16x128xf32>
    %cst_5 = arith.constant 0.000000e+00 : f32
    %6 = vector.broadcast %cst_5 : f32 to vector<16x128xf32>
    %7 = arith.cmpf oge, %5, %6 : vector<16x128xf32>
    %cst_6 = arith.constant 1.000000e-01 : f32
    %8 = vector.broadcast %cst_6 : f32 to vector<16x128xf32>
    %9 = arith.mulf %8, %5 : vector<16x128xf32>
    %10 = arith.select %7, %5, %9 : vector<16x128xi1>, vector<16x128xf32>
    %c0_7 = arith.constant 0 : index
    %c0_8 = arith.constant 0 : index
    %11 = vector.load %arg5[%c0_7, %c0_8] : memref<16x128xf32, #tpu.memory_space<vmem>>, vector<16x128xf32>
    tpu.vector_store %arg5[%c0_7, %c0_8], %10 {strides = array<i32>} : memref<16x128xf32, #tpu.memory_space<vmem>>, vector<16x128xf32>,
    return
  }
  func.func @transform_0(%arg0: i32, %arg1: i32) -> (i32, i32) {
    %c0_i32 = arith.constant 0 : i32
    %c0_i32_0 = arith.constant 0 : i32
    return %arg1, %c0_i32 : i32, i32
  }
  func.func @transform_1(%arg0: i32, %arg1: i32) -> (i32, i32) {
    %c0_i32 = arith.constant 0 : i32
    %c0_i32_0 = arith.constant 0 : i32
    return %c0_i32, %arg0 : i32, i32
  }
  func.func @transform_2(%arg0: i32, %arg1: i32) -> (i32, i32) {
    %c0_i32 = arith.constant 0 : i32
    %c0_i32_0 = arith.constant 0 : i32
    return %c0_i32, %arg0 : i32, i32
  }
  func.func @transform_3(%arg0: i32, %arg1: i32) -> (i32, i32) {
    %c0_i32 = arith.constant 0 : i32
    return %arg1, %arg0 : i32, i32
  }
}

</mosaic_0001>

<llo_original>
// kernel: tpu_custom_call.1
$region0: #{tpu_custom_call.1}
  #allocation0 [shape = 'u32[]', space=smem, size = 0x4, offset = 0x4, fixed_abs, tag = 'smem constant byte address 0x4 - core index']
  #allocation1 [shape = 'u32[144,128]{1,0:T(1,128)}', space=vmem, size = 0x12000, scoped, tag = 'internal scratch']
  %s0 = inlined_call_operand.hbm [shape: f32[16,32], index: 0, kind: input, shape index: {}]
  %s1 = inlined_call_operand.hbm [shape: f32[32,128], index: 1, kind: input, shape index: {}]
  %s2 = inlined_call_operand.vmem [shape: f32[1,128], index: 2, kind: input, shape index: {}]
  %s3 = inlined_call_operand.hbm [shape: f32[16,128], index: 3, kind: output, shape index: {}]
  %s4 = sld [smem:[#allocation0]]
  $region30: #{tpu_custom_call.1} parent=0
    _
  %s6 = ssub.s32 1, %s4
  %s7 = scalar_select 0, %s6, %s4
  $region1: #{tpu_custom_call.1} parent=0
    #allocation2 [shape = 'u8[8192]{0}', space=vmem, size = 0x2000, scoped, tag = 'input window, operand 0, single buffered']
    #allocation3 [shape = 's32[1]{0}', space=sflag, size = 0x4, scoped, tag = 'scoped memory for tpu_custom_call.1']
    #allocation4 [shape = 's32[1]{0}', space=sflag, size = 0x4, scoped, tag = 'scoped memory for tpu_custom_call.1']
    #allocation5 [shape = 'u8[16384]{0}', space=vmem, size = 0x4000, scoped, tag = 'input window, operand 1, single buffered']
    #allocation6 [shape = 's32[1]{0}', space=sflag, size = 0x4, scoped, tag = 'scoped memory for tpu_custom_call.1']
    #allocation7 [shape = 'u8[8192]{0}', space=vmem, size = 0x2000, scoped, tag = 'output window, operand 0, single buffered']
    %8 = vsyncpa [#allocation3], 0
    %9 = vsyncpa [#allocation6], 0
    %10 = vsyncpa [#allocation4], 0
    // Predicated region
    $region2: #{tpu_custom_call.1} parent=1 // pred_check
      _
    $region3: #{tpu_custom_call.1} parent=1 // pred_check_branch
      %12 = sbr.rel (0) target = $region5
    $region4: #{tpu_custom_call.1} parent=1 // pred_region
      %s14 = ssub.s32 256, 256
      %15 = vsyncadd [#allocation3], %s14
      %s16 = sshll.u32 [#allocation2], 4
      %s17 = int_to_ptr.vmem [resolvable:$true] %s16
      %22 = dma.hbm_to_vmem [thread:$0]  %s0, 256, %s17, [#allocation3], 128, 128, 8
    $region5: #{tpu_custom_call.1} parent=1 // pred_fallthru
      _
    // Predicated region
    $region6: #{tpu_custom_call.1} parent=1 // pred_check
      _
    $region7: #{tpu_custom_call.1} parent=1 // pred_check_branch
      %24 = sbr.rel (0) target = $region9
    $region8: #{tpu_custom_call.1} parent=1 // pred_region
      %s26 = ssub.s32 512, 512
      %27 = vsyncadd [#allocation6], %s26
      %s28 = sshll.u32 [#allocation5], 4
      %s29 = int_to_ptr.vmem [resolvable:$true] %s28
      %34 = dma.hbm_to_vmem [thread:$0]  %s1, 512, %s29, [#allocation6], 128, 128, 8
    $region9: #{tpu_custom_call.1} parent=1 // pred_fallthru
      _
    // Predicated region
    $region10: #{tpu_custom_call.1} parent=1 // pred_check
      _
    $region11: #{tpu_custom_call.1} parent=1 // pred_check_branch
      %36 = sbr.rel (0) target = $region13
    $region12: #{tpu_custom_call.1} parent=1 // pred_region
      _
    $region13: #{tpu_custom_call.1} parent=1 // pred_fallthru
      _
    // Predicated region
    $region14: #{tpu_custom_call.1} parent=1 // pred_check
      _
    $region15: #{tpu_custom_call.1} parent=1 // pred_check_branch
      %38 = sbr.rel (0) target = $region17
    $region16: #{tpu_custom_call.1} parent=1 // pred_region
      %39 = dma.done [#allocation3], 256
    $region17: #{tpu_custom_call.1} parent=1 // pred_fallthru
      _
    // Predicated region
    $region18: #{tpu_custom_call.1} parent=1 // pred_check
      _
    $region19: #{tpu_custom_call.1} parent=1 // pred_check_branch
      %41 = sbr.rel (0) target = $region21
    $region20: #{tpu_custom_call.1} parent=1 // pred_region
      %42 = dma.done [#allocation6], 512
    $region21: #{tpu_custom_call.1} parent=1 // pred_fallthru
      _
    %v43 = vld [vmem:[#allocation2] sm:$0xff]
    %v44 = vld [vmem:[#allocation2 + $0x8] sm:$0xff]
    %v45 = vld [vmem:[#allocation5] sm:$0xff]
    %v46 = vld [vmem:[#allocation5 + $0x8] sm:$0xff]
    %v47 = vld [vmem:[#allocation5 + $0x10] sm:$0xff]
    %v48 = vld [vmem:[#allocation5 + $0x18] sm:$0xff]
    %v49 = vld [vmem:[%s2] sm:$0x1]
    %v51 = vlaneseq
    %v52 = vshrl.u32 %v51, 7
    %v53 = vsub.s32 0, %v52
    %v54 = vrot.slane %v49, %v53
    %vm56 = vcmask 261120
    %v58 = vsel %vm56, %v43, 0
    %v61 = vsel %vm56, %v44, 0
    %63 = vmatprep.subr.mxu0 0.0
    %64 = vmatpush1.msra.mxu0 %v45
    %65 = vmatprep.subr.mxu0 0.0
    %66 = vmatpush1.msra.mxu0 %v46
    %67 = vmatprep.subr.mxu0 0.0
    %68 = vmatpush1.msra.mxu0 %v47
    %69 = vmatprep.subr.mxu0 0.0
    %70 = vmatpush1.msra.mxu0 %v48
    %71 = vmatprep.subr.mxu0 0.0
    %72 = vmatpush1.msra.mxu0 0.0
    %73 = vmatprep.subr.mxu0 0.0
    %74 = vmatpush1.msra.mxu0 0.0
    %75 = vmatprep.subr.mxu0 0.0
    %76 = vmatpush1.msra.mxu0 0.0
    %77 = vmatprep.subr.mxu0 0.0
    %78 = vmatpush1.msra.mxu0 0.0
    %79 = vmatprep.subr.mxu0 0.0
    %80 = vmatpush1.msra.mxu0 0.0
    %81 = vmatprep.subr.mxu0 0.0
    %82 = vmatpush1.msra.mxu0 0.0
    %83 = vmatprep.subr.mxu0 0.0
    %84 = vmatpush1.msra.mxu0 0.0
    %85 = vmatprep.subr.mxu0 0.0
    %86 = vmatpush1.msra.mxu0 0.0
    %87 = vmatprep.subr.mxu0 0.0
    %88 = vmatpush1.msra.mxu0 0.0
    %89 = vmatprep.subr.mxu0 0.0
    %90 = vmatpush1.msra.mxu0 0.0
    %91 = vmatprep.subr.mxu0 0.0
    %92 = vmatpush1.msra.mxu0 0.0
    %93 = vmatprep.subr.mxu0 0.0
    %94 = vmatpush1.msra.mxu0 0.0
    %95 = vmatprep.subr.mxu0 0.0
    %96 = vmatpush1.msra.mxu0 0.0
    %97 = vmatprep.subr.mxu0 0.0
    %98 = vmatpush1.msra.mxu0 0.0
    %99 = vmatprep.subr.mxu0 0.0
    %100 = vmatpush1.msra.mxu0 0.0
    %101 = vmatprep.subr.mxu0 0.0
    %102 = vmatpush1.msra.mxu0 0.0
    %103 = vmatprep.subr.mxu0 0.0
    %104 = vmatpush1.msra.mxu0 0.0
    %105 = vmatprep.subr.mxu0 0.0
    %106 = vmatpush1.msra.mxu0 0.0
    %107 = vmatprep.subr.mxu0 0.0
    %108 = vmatpush1.msra.mxu0 0.0
    %109 = vmatprep.subr.mxu0 0.0
    %110 = vmatpush1.msra.mxu0 0.0
    %111 = vmatprep.subr.mxu0 0.0
    %112 = vmatpush1.msra.mxu0 0.0
    %113 = vmatprep.subr.mxu0 0.0
    %114 = vmatpush1.msra.mxu0 0.0
    %115 = vmatprep.subr.mxu0 0.0
    %116 = vmatpush1.msra.mxu0 0.0
    %117 = vmatprep.subr.mxu0 0.0
    %118 = vmatpush1.msra.mxu0 0.0
    %119 = vmatprep.subr.mxu0 0.0
    %120 = vmatpush1.msra.mxu0 0.0
    %121 = vmatprep.subr.mxu0 0.0
    %122 = vmatpush1.msra.mxu0 0.0
    %123 = vmatprep.subr.mxu0 0.0
    %124 = vmatpush1.msra.mxu0 0.0
    %125 = vmatprep.subr.mxu0 0.0
    %126 = vmatpush1.msra.mxu0 0.0
    %127 = vmatprep.mubr.f32.mxu0 0.0
    %128 = vmatmul.mubr.f32.gmra.mrb[0].mxu0 %v58
    %v129 = vpop.f32.mrb[0].mxu0
    %v130 = vadd.f32 %v54, %v129
    %v131 = vpop.f32.mrb[0].mxu0
    %132 = vmatprep.mubr.f32.mxu0 0.0
    %133 = vmatmul.mubr.f32.gmra.mrb[0].mxu0 %v61
    %v134 = vpop.f32.mrb[0].mxu0
    %v135 = vadd.f32 %v54, %v134
    %v136 = vpop.f32.mrb[0].mxu0
    %137 = vdwg.mxu0
    %vm138 = vcmp.ge.f32.partialorder %v130, 0.0
    %vm139 = vcmp.ge.f32.partialorder %v135, 0.0
    %v140 = vmul.f32 %v130, 0.1
    %v141 = vmul.f32 %v135, 0.1
    %v142 = vsel %vm138, %v130, %v140
    %v143 = vsel %vm139, %v135, %v141
    %144 = vst [vmem:[#allocation7] sm:$0xff] %v142
    %145 = vst [vmem:[#allocation7 + $0x8] sm:$0xff] %v143
    // Predicated region
    $region22: #{tpu_custom_call.1} parent=1 // pred_check
      _
    $region23: #{tpu_custom_call.1} parent=1 // pred_check_branch
      %147 = sbr.rel (0) target = $region25
    $region24: #{tpu_custom_call.1} parent=1 // pred_region
      %s149 = ssub.s32 256, 256
      %150 = vsyncadd [#allocation4], %s149
      %s151 = sshll.u32 [#allocation7], 4
      %s152 = int_to_ptr.vmem [resolvable:$true] %s151
      %157 = dma.vmem_to_hbm [thread:$0]  %s152, 256, %s3, [#allocation4], 128, 128, 8
    $region25: #{tpu_custom_call.1} parent=1 // pred_fallthru
      _
    // Predicated region
    $region26: #{tpu_custom_call.1} parent=1 // pred_check
      _
    $region27: #{tpu_custom_call.1} parent=1 // pred_check_branch
      %159 = sbr.rel (0) target = $region29
    $region28: #{tpu_custom_call.1} parent=1 // pred_region
      %160 = dma.done [#allocation4], 256
    $region29: #{tpu_custom_call.1} parent=1 // pred_fallthru
      _
    %161 = vsyncpa [#allocation3], 1
    %162 = vsyncpa [#allocation6], 1
    %163 = vsyncpa [#allocation4], 1

</llo_original>
